<compile_context>
chip_gen: v7x
topology: tpu7x:2x2x1
jax: 0.10.0
libtpu: 0.0.40
codegen_flags: <defaults>
</compile_context>

<pallas_src>
import functools
import math

import jax
import jax.numpy as jnp
from jax.experimental import pallas as pl
from jax.experimental.pallas import tpu as pltpu


# --------------------------------------------------------------------------
# Kernels
# --------------------------------------------------------------------------
def _pad_rows_kernel(x_ref, o_ref, *, pad_left, pad_right, t_in):
    """Path 1: full-width rows; pad columns on the last axis."""
    rows = o_ref.shape[0]
    dtype = o_ref.dtype
    if pad_left % 128 == 0:
        # Lane-aligned interior: zero only the pad slices, store interior once.
        if pad_left > 0:
            o_ref[:, :pad_left] = jnp.zeros((rows, pad_left), dtype)
        if pad_right > 0:
            o_ref[:, pad_left + t_in:] = jnp.zeros((rows, pad_right), dtype)
        o_ref[:, pad_left:pad_left + t_in] = x_ref[...]
    else:
        # Unaligned pad_left: build the full-width tile in registers (shift
        # work goes to the XLU slot) and do one unmasked, lane-dense store.
        parts = []
        if pad_left > 0:
            parts.append(jnp.zeros((rows, pad_left), dtype))
        parts.append(x_ref[...])
        if pad_right > 0:
            parts.append(jnp.zeros((rows, pad_right), dtype))
        o_ref[...] = jnp.concatenate(parts, axis=1)


def _pad_cols_kernel(*refs, pad_left, t_in, tc, has_halo):
    """Path 2: output-column-tiled pad with a static left halo."""
    if has_halo:
        xa_ref, xb_ref, o_ref = refs          # xa = block (c-q-1), xb = (c-q)
    else:
        xb_ref, o_ref = refs
        xa_ref = None
    ci = pl.program_id(1)
    rows = o_ref.shape[0]
    dtype = o_ref.dtype
    r = pad_left % tc

    if has_halo:
        # Input columns needed by this output tile start at ci*tc - pad_left,
        # i.e. the last r columns of block (ci-q-1) followed by the first
        # tc-r columns of block (ci-q).
        data = jnp.concatenate([xa_ref[:, tc - r:], xb_ref[:, :tc - r]],
                               axis=1)
    else:
        data = xb_ref[...]

    # Global output-column index of every element in this tile.
    col = ci * tc + jax.lax.broadcasted_iota(jnp.int32, (rows, tc), 1)
    valid = (col >= pad_left) & (col < pad_left + t_in)
    o_ref[...] = jnp.where(valid, data, jnp.zeros((), dtype))


# --------------------------------------------------------------------------
# Tiling helpers
# --------------------------------------------------------------------------
def _vmem_capacity_bytes():
    try:
        return int(pltpu.get_tpu_info().vmem_capacity_bytes)
    except Exception:
        return 64 * 1024 * 1024  # conservative default (v7x)


def _sublane(itemsize):
    return max(8, 32 // max(itemsize, 1))  # 8 f32, 16 bf16, 32 int8


def _choose_row_tile(num_rows, t_in, t_out, itemsize, block_budget):
    """Largest sublane-aligned row tile whose (in+out) block fits the budget.

    Returns None when even a single sublane group of full-width rows exceeds
    the budget (caller falls back to column tiling).
    """
    sub = _sublane(itemsize)
    rows_padded = pl.cdiv(num_rows, sub) * sub
    per_row = (t_in + t_out) * itemsize
    tr = (block_budget // max(per_row, 1)) // sub * sub
    if tr < sub:
        return None
    tr = min(tr, rows_padded)
    # Enough grid steps for both v7x TensorCores / pipelining, but keep each
    # block above the ~512-row efficiency knee.
    min_steps = 8
    knee = 512
    tr_for_steps = pl.cdiv(pl.cdiv(rows_padded, min_steps), sub) * sub
    tr = min(tr, max(knee, tr_for_steps))
    return max(sub, min(tr, rows_padded))


def _choose_col_tiles(num_rows, t_out, itemsize, block_budget):
    """Tiles for the column-tiled path: 3 blocks (halo-in, in, out) of (tr,tc)."""
    sub = _sublane(itemsize)
    rows_padded = pl.cdiv(num_rows, sub) * sub
    tc = (block_budget // (sub * 3 * max(itemsize, 1))) // 128 * 128
    tc = max(128, tc)
    tc = min(tc, pl.cdiv(t_out, 128) * 128)
    tr = (block_budget // (3 * tc * max(itemsize, 1))) // sub * sub
    tr = max(sub, min(tr, rows_padded))
    return tr, tc


# --------------------------------------------------------------------------
# Wrapper (== ZeroPad1d(pad_left, pad_right).forward)
# --------------------------------------------------------------------------
def zero_pad_1d(x, pad_left, pad_right, *, block_budget_bytes=None):
    """torch.nn.functional.pad(x, (pad_left, pad_right)) on the last axis."""
    *lead, t = x.shape

    # Negative padding == cropping; free XLA slice in the wrapper.
    crop_l, crop_r = max(0, -pad_left), max(0, -pad_right)
    if crop_l or crop_r:
        x = x[..., crop_l:t - crop_r]
        t = x.shape[-1]
    pad_l, pad_r = max(0, pad_left), max(0, pad_right)
    t_out = pad_l + t + pad_r

    if pad_l == 0 and pad_r == 0:
        return x  # no-op (possibly after crop): skip the kernel entirely
    if t == 0:
        return jnp.zeros((*lead, t_out), x.dtype)

    num_rows = math.prod(lead) if lead else 1
    if num_rows == 0:
        return jnp.zeros((*lead, t_out), x.dtype)

    x2 = x.reshape(num_rows, t)  # row-major contiguous: free
    itemsize = jnp.dtype(x.dtype).itemsize

    cap = _vmem_capacity_bytes()
    # Per-(in+out)-block budget ~ cap/8: 8 MiB on v7x (64 MiB VMEM),
    # 16 MiB on v5e/v6e (128 MiB VMEM); double-buffered ~= cap/4 in flight.
    budget = (block_budget_bytes if block_budget_bytes is not None
              else max(4 * 1024 * 1024, min(16 * 1024 * 1024, cap // 8)))
    vmem_limit = min(int(cap * 0.6),
                     max(32 * 1024 * 1024, 3 * budget + (8 << 20)))
    cost = pl.CostEstimate(flops=0, transcendentals=0,
                           bytes_accessed=num_rows * (t + t_out) * itemsize)

    tr = _choose_row_tile(num_rows, t, t_out, itemsize, budget)

    if tr is not None:
        # ---- Path 1: row tiling, full-width blocks -----------------------
        kernel = functools.partial(_pad_rows_kernel, pad_left=pad_l,
                                   pad_right=pad_r, t_in=t)
        out2 = pl.pallas_call(
            kernel,
            out_shape=jax.ShapeDtypeStruct((num_rows, t_out), x.dtype),
            grid_spec=pltpu.PrefetchScalarGridSpec(
                num_scalar_prefetch=0,
                grid=(pl.cdiv(num_rows, tr),),
                in_specs=[pl.BlockSpec((tr, t), lambda r: (r, 0))],
                out_specs=pl.BlockSpec((tr, t_out), lambda r: (r, 0)),
            ),
            compiler_params=pltpu.CompilerParams(
                dimension_semantics=("parallel",),
                vmem_limit_bytes=vmem_limit),
            cost_estimate=cost,
        )(x2)
    else:
        # ---- Path 2: row + output-column tiling (few rows / long T) ------
        tr, tc = _choose_col_tiles(num_rows, t_out, itemsize, budget)
        q, r = pad_l // tc, pad_l % tc
        n_in_col_blocks = pl.cdiv(t, tc)
        has_halo = r > 0

        def in_col(ci, shift):
            return jnp.clip(ci - shift, 0, n_in_col_blocks - 1)

        main_spec = pl.BlockSpec((tr, tc), lambda ri, ci: (ri, in_col(ci, q)))
        in_specs = [main_spec]
        operands = [x2]
        if has_halo:
            halo_spec = pl.BlockSpec((tr, tc),
                                     lambda ri, ci: (ri, in_col(ci, q + 1)))
            in_specs = [halo_spec, main_spec]
            operands = [x2, x2]

        kernel = functools.partial(_pad_cols_kernel, pad_left=pad_l, t_in=t,
                                   tc=tc, has_halo=has_halo)
        out2 = pl.pallas_call(
            kernel,
            out_shape=jax.ShapeDtypeStruct((num_rows, t_out), x.dtype),
            grid_spec=pltpu.PrefetchScalarGridSpec(
                num_scalar_prefetch=0,
                grid=(pl.cdiv(num_rows, tr), pl.cdiv(t_out, tc)),
                in_specs=in_specs,
                out_specs=pl.BlockSpec((tr, tc), lambda ri, ci: (ri, ci)),
            ),
            compiler_params=pltpu.CompilerParams(
                dimension_semantics=("parallel", "parallel"),
                vmem_limit_bytes=vmem_limit),
            cost_estimate=cost,
        )(*operands)

    return out2.reshape(*lead, t_out)


# --------------------------------------------------------------------------
# Tests
# --------------------------------------------------------------------------
if __name__ == "__main__":
    key = jax.random.PRNGKey(0)
    B, C, T = 2, 4, 16
    pad_left, pad_right = 3, 5
    x = jax.random.normal(key, (B, C, T), dtype=jnp.float32)

    # Main path: unaligned pad_left -> full-tile register build + one store.
    out = jax.block_until_ready(zero_pad_1d(x, pad_left, pad_right))
    ref = jnp.pad(x, ((0, 0), (0, 0), (pad_left, pad_right)))
    assert out.shape == (B, C, pad_left + T + pad_right), out.shape
    assert jnp.allclose(out, ref), "mismatch vs reference (main path)"

    # Lane-aligned (pad_left == 0) slice-store fast path.
    out2 = jax.block_until_ready(zero_pad_1d(x, 0, 5))
    assert jnp.allclose(out2, jnp.pad(x, ((0, 0), (0, 0), (0, 5))))

    # Negative pad (crop) on the left + positive pad on the right.
    out3 = jax.block_until_ready(zero_pad_1d(x, -2, 3))
    assert jnp.allclose(out3, jnp.pad(x[..., 2:], ((0, 0), (0, 0), (0, 3))))

    # Column-tiled path (forced tiny block budget), halo case (pad_l % tc != 0).
    x4 = jax.random.normal(jax.random.PRNGKey(0), (2, 3, 300), jnp.float32)
    out4 = jax.block_until_ready(
        zero_pad_1d(x4, 5, 3, block_budget_bytes=16 * 1024))
    assert jnp.allclose(out4, jnp.pad(x4, ((0, 0), (0, 0), (5, 3))))

    # Column-tiled path with pad_left spanning more than one column tile.
    out5 = jax.block_until_ready(
        zero_pad_1d(x4, 200, 0, block_budget_bytes=16 * 1024))
    assert jnp.allclose(out5, jnp.pad(x4, ((0, 0), (0, 0), (200, 0))))

    print("KERNEL_OK")
</pallas_src>

<mosaic_0001>
module attributes {stable_mosaic.version = 11 : i64} {
  func.func @_pad_rows_kernel(%arg0: i32, %arg1: memref<8x16xf32, #tpu.memory_space<vmem>>, %arg2: memref<8x24xf32, #tpu.memory_space<vmem>>) attributes {dimension_semantics = [#tpu.dimension_semantics<parallel>], iteration_bounds = array<i64: 1>, scalar_prefetch = 0 : i64, scratch_operands = 0 : i64, tpu.core_type = #tpu.core_type<tc>, window_params = [{transform_indices = @transform_0, window_bounds = array<i64: 8, 16>}, {transform_indices = @transform_1, window_bounds = array<i64: 8, 24>}]} {
    %cst = arith.constant 0.000000e+00 : f32
    %0 = vector.broadcast %cst : f32 to vector<8x3xf32>
    %c0 = arith.constant 0 : index
    %c0_0 = arith.constant 0 : index
    %1 = vector.load %arg1[%c0, %c0_0] : memref<8x16xf32, #tpu.memory_space<vmem>>, vector<8x16xf32>
    %cst_1 = arith.constant 0.000000e+00 : f32
    %2 = vector.broadcast %cst_1 : f32 to vector<8x5xf32>
    %3 = tpu.concatenate %0, %1, %2 in 1 : vector<8x3xf32>, vector<8x16xf32>, vector<8x5xf32> -> vector<8x24xf32>
    %c0_2 = arith.constant 0 : index
    %c0_3 = arith.constant 0 : index
    %4 = vector.load %arg2[%c0_2, %c0_3] : memref<8x24xf32, #tpu.memory_space<vmem>>, vector<8x24xf32>
    tpu.vector_store %arg2[%c0_2, %c0_3], %3 {strides = array<i32>} : memref<8x24xf32, #tpu.memory_space<vmem>>, vector<8x24xf32>,
    return
  }
  func.func @transform_0(%arg0: i32) -> (i32, i32) {
    %c0_i32 = arith.constant 0 : i32
    %c0_i32_0 = arith.constant 0 : i32
    return %arg0, %c0_i32 : i32, i32
  }
  func.func @transform_1(%arg0: i32) -> (i32, i32) {
    %c0_i32 = arith.constant 0 : i32
    %c0_i32_0 = arith.constant 0 : i32
    return %arg0, %c0_i32 : i32, i32
  }
}

</mosaic_0001>

<llo_original>
// kernel: tpu_custom_call.1
$region0: #{tpu_custom_call.1}
  #allocation0 [shape = 'u32[]', space=smem, size = 0x4, offset = 0x4, fixed_abs, tag = 'smem constant byte address 0x4 - core index']
  #allocation1 [shape = 'u32[144,128]{1,0:T(1,128)}', space=vmem, size = 0x12000, scoped, tag = 'internal scratch']
  %s0 = inlined_call_operand.hbm [shape: f32[8,16], index: 0, kind: input, shape index: {}]
  %s1 = inlined_call_operand.hbm [shape: f32[8,24], index: 1, kind: output, shape index: {}]
  %s2 = sld [smem:[#allocation0]]
  $region18: #{tpu_custom_call.1} parent=0
    _
  %s4 = ssub.s32 1, %s2
  %s5 = scalar_select 0, %s4, %s2
  $region1: #{tpu_custom_call.1} parent=0
    #allocation2 [shape = 'u8[4096]{0}', space=vmem, size = 0x1000, scoped, tag = 'input window, operand 0, single buffered']
    #allocation3 [shape = 's32[1]{0}', space=sflag, size = 0x4, scoped, tag = 'scoped memory for tpu_custom_call.1']
    #allocation4 [shape = 's32[1]{0}', space=sflag, size = 0x4, scoped, tag = 'scoped memory for tpu_custom_call.1']
    #allocation5 [shape = 'u8[4096]{0}', space=vmem, size = 0x1000, scoped, tag = 'output window, operand 0, single buffered']
    %6 = vsyncpa [#allocation3], 0
    %7 = vsyncpa [#allocation4], 0
    // Predicated region
    $region2: #{tpu_custom_call.1} parent=1 // pred_check
      _
    $region3: #{tpu_custom_call.1} parent=1 // pred_check_branch
      %9 = sbr.rel (0) target = $region5
    $region4: #{tpu_custom_call.1} parent=1 // pred_region
      %s11 = ssub.s32 128, 128
      %12 = vsyncadd [#allocation3], %s11
      %s14 = sshll.u32 [#allocation2], 4
      %s15 = int_to_ptr.vmem [resolvable:$true] %s14
      %17 = dma.hbm_to_vmem [thread:$0]  %s0, 128, %s15, [#allocation3]
    $region5: #{tpu_custom_call.1} parent=1 // pred_fallthru
      _
    // Predicated region
    $region6: #{tpu_custom_call.1} parent=1 // pred_check
      _
    $region7: #{tpu_custom_call.1} parent=1 // pred_check_branch
      %19 = sbr.rel (0) target = $region9
    $region8: #{tpu_custom_call.1} parent=1 // pred_region
      %20 = dma.done [#allocation3], 128
    $region9: #{tpu_custom_call.1} parent=1 // pred_fallthru
      _
    %v21 = vld [vmem:[#allocation2] sm:$0xff]
    %23 = vrot.lane.b32.xlu0 %v21, 3
    %v24 = vpop.permute.xlu0 %23
    %vm26 = vcmask 23552
    %v27 = vsel %vm26, 0.0, %v24
    %vm28 = vcmask 154624
    %v29 = vsel %vm28, %v27, 0.0
    %vm30 = vcmask 195584
    %31 = vst.msk [vmem:[#allocation5] sm:$0xff] %vm30, %v29
    // Predicated region
    $region10: #{tpu_custom_call.1} parent=1 // pred_check
      _
    $region11: #{tpu_custom_call.1} parent=1 // pred_check_branch
      %33 = sbr.rel (0) target = $region13
    $region12: #{tpu_custom_call.1} parent=1 // pred_region
      %s35 = ssub.s32 128, 128
      %36 = vsyncadd [#allocation4], %s35
      %s38 = sshll.u32 [#allocation5], 4
      %s39 = int_to_ptr.vmem [resolvable:$true] %s38
      %41 = dma.vmem_to_hbm [thread:$0]  %s39, 128, %s1, [#allocation4]
    $region13: #{tpu_custom_call.1} parent=1 // pred_fallthru
      _
    // Predicated region
    $region14: #{tpu_custom_call.1} parent=1 // pred_check
      _
    $region15: #{tpu_custom_call.1} parent=1 // pred_check_branch
      %43 = sbr.rel (0) target = $region17
    $region16: #{tpu_custom_call.1} parent=1 // pred_region
      %44 = dma.done [#allocation4], 128
    $region17: #{tpu_custom_call.1} parent=1 // pred_fallthru
      _
    %45 = vsyncpa [#allocation3], 1
    %46 = vsyncpa [#allocation4], 1

</llo_original>
